<compile_context>
chip_gen: v7x
topology: tpu7x:2x2x1
jax: 0.10.0
libtpu: 0.0.40
codegen_flags: <defaults>
</compile_context>

<pallas_src>
import jax
import jax.numpy as jnp
from jax.experimental import pallas as pl
from jax.experimental.pallas import tpu as pltpu

NEG_SLOPE = 0.01       # nn.LeakyReLU default negative slope
HIDDEN = 256
BATCH_TILE = 1024      # max batch rows per grid step (multiple of 8)
LANE = 128


def _round_up(x, m):
    return ((x + m - 1) // m) * m


def dueling_mlp_kernel(state_ref, w1_ref, b1_ref, w2_ref, b2_ref, q_ref):
    a = q_ref.shape[-1]                        # true action_dim

    # ----- fused layer 1 (adv | v branches packed along the lane axis) -----
    # bf16 operands -> single-pass MXU issue, f32 accumulation.
    x = state_ref[...].astype(jnp.bfloat16)
    h = jnp.dot(x, w1_ref[...], preferred_element_type=jnp.float32) + b1_ref[...]
    h = jnp.where(h >= 0, h, NEG_SLOPE * h)    # LeakyReLU in f32 (safe on v5e VPU)
    # TODO(synk): dropout is identity here (inference mode only).

    # ----- fused layer 2 (block-diag weight, lane-padded to 128 columns) -----
    out = jnp.dot(h.astype(jnp.bfloat16), w2_ref[...],
                  preferred_element_type=jnp.float32) + b2_ref[...]

    adv = out[:, :a]                           # [bt, A]
    v = out[:, a:a + 1]                        # [bt, 1]

    # ----- dueling combine -----
    adv = adv - jnp.max(adv, axis=1, keepdims=True)
    q_ref[...] = (adv + v).astype(q_ref.dtype)


def pack_params(params, action_dim, weight_dtype=jnp.bfloat16):
    """Pack both branches into 4 arrays: W1 [S,2H], b1 [1,2H], W2 [2H,128], b2 [1,128]."""
    w_adv1, b_adv1, w_adv2, b_adv2, w_v1, b_v1, w_v2, b_v2 = params
    hidden = w_adv2.shape[0]
    out_pad = max(LANE, _round_up(action_dim + 1, LANE))   # lane-dense layer-2 output

    w1 = jnp.concatenate([w_adv1, w_v1], axis=1).astype(weight_dtype)   # [S, 2H]
    b1 = jnp.concatenate([b_adv1, b_v1], axis=1).astype(jnp.float32)    # [1, 2H]

    w2 = jnp.zeros((2 * hidden, out_pad), jnp.float32)
    w2 = w2.at[:hidden, :action_dim].set(w_adv2)                        # adv head
    w2 = w2.at[hidden:, action_dim:action_dim + 1].set(w_v2)            # v head
    w2 = w2.astype(weight_dtype)                                        # [2H, 128]

    b2 = jnp.zeros((1, out_pad), jnp.float32)
    b2 = b2.at[:, :action_dim].set(b_adv2)
    b2 = b2.at[:, action_dim:action_dim + 1].set(b_v2)                  # [1, 128]
    return w1, b1, w2, b2


def dueling_mlp_forward(state, packed, action_dim):
    w1, b1, w2, b2 = packed
    B, S = state.shape
    A = action_dim

    # Sub-sublane batches: pad to one sublane (8 rows) — tiny copy.
    if B < 8:
        state_in = jnp.zeros((8, S), state.dtype).at[:B].set(state)
        B_work = 8
    else:
        state_in = state
        B_work = B

    # Batch tile: cap at BATCH_TILE, but aim for >= 2 grid steps when the
    # batch allows it (lets the "parallel" axis shard over both v7x TCs; the
    # extra grid step is ~0.35us, negligible on single-TC v5e/v6e).
    if B_work <= 8:
        bt = 8
    else:
        bt = min(BATCH_TILE, _round_up(pl.cdiv(B_work, 2), 8))
    nb = pl.cdiv(B_work, bt)   # ragged last block: Pallas pads reads, masks writes

    h2 = w1.shape[1]
    c2 = w2.shape[1]
    cost = pl.CostEstimate(
        flops=2 * B_work * S * h2 + 2 * B_work * h2 * c2,
        transcendentals=0,
        bytes_accessed=(state_in.size * state_in.dtype.itemsize
                        + w1.size * w1.dtype.itemsize
                        + w2.size * w2.dtype.itemsize
                        + b1.size * 4 + b2.size * 4
                        + B_work * A * 4))

    q = pl.pallas_call(
        dueling_mlp_kernel,
        out_shape=jax.ShapeDtypeStruct((B_work, A), jnp.float32),
        grid=(nb,),
        in_specs=[
            pl.BlockSpec((bt, S), lambda i: (i, 0)),        # state tile (only thing streamed)
            pl.BlockSpec(w1.shape, lambda i: (0, 0)),       # weights VMEM-resident
            pl.BlockSpec(b1.shape, lambda i: (0, 0)),
            pl.BlockSpec(w2.shape, lambda i: (0, 0)),
            pl.BlockSpec(b2.shape, lambda i: (0, 0)),
        ],
        out_specs=pl.BlockSpec((bt, A), lambda i: (i, 0)),
        compiler_params=pltpu.CompilerParams(
            dimension_semantics=("parallel",),
            vmem_limit_bytes=32 * 1024 * 1024),
        cost_estimate=cost,
    )(state_in, w1, b1, w2, b2)

    return q[:B] if B_work != B else q


def init_params(key, state_dim, action_dim, hidden=HIDDEN):
    """Deterministic PyTorch-Linear-style init (uniform +/- 1/sqrt(fan_in))."""
    keys = jax.random.split(key, 8)

    def linear(kw, kb, fan_in, fan_out):
        bound = 1.0 / jnp.sqrt(jnp.float32(fan_in))
        w = jax.random.uniform(kw, (fan_in, fan_out), jnp.float32, -bound, bound)
        b = jax.random.uniform(kb, (1, fan_out), jnp.float32, -bound, bound)
        return w, b

    w_adv1, b_adv1 = linear(keys[0], keys[1], state_dim, hidden)
    w_adv2, b_adv2 = linear(keys[2], keys[3], hidden, action_dim)
    w_v1,   b_v1   = linear(keys[4], keys[5], state_dim, hidden)
    w_v2,   b_v2   = linear(keys[6], keys[7], hidden, 1)
    return (w_adv1, b_adv1, w_adv2, b_adv2, w_v1, b_v1, w_v2, b_v2)


def reference_forward(state, packed, action_dim):
    """Pure-JAX reference mirroring the kernel's bf16-operand / f32-accum math."""
    w1, b1, w2, b2 = packed
    x = state.astype(jnp.bfloat16)
    h = jnp.dot(x, w1, preferred_element_type=jnp.float32) + b1
    h = jnp.where(h >= 0, h, NEG_SLOPE * h)
    out = jnp.dot(h.astype(jnp.bfloat16), w2, preferred_element_type=jnp.float32) + b2
    adv = out[:, :action_dim]
    v = out[:, action_dim:action_dim + 1]
    adv = adv - jnp.max(adv, axis=1, keepdims=True)
    return adv + v


if __name__ == "__main__":
    key = jax.random.PRNGKey(0)
    k_state, k_state_big, k_params = jax.random.split(key, 3)

    state_dim = 32
    action_dim = 8

    params = init_params(k_params, state_dim, action_dim)
    packed = pack_params(params, action_dim)

    # --- small batch (padded to one sublane internally, single grid step) ---
    batch = 2
    state = jax.random.normal(k_state, (batch, state_dim), jnp.float32)
    q = jax.block_until_ready(dueling_mlp_forward(state, packed, action_dim))
    q_ref = reference_forward(state, packed, action_dim)
    assert q.shape == (batch, action_dim)
    assert jnp.allclose(q, q_ref, atol=2e-3, rtol=2e-3), (q, q_ref)

    # --- larger batch (2-step grid, ragged last block, no wrapper pad copy) ---
    batch_big = 300
    state_big = jax.random.normal(k_state_big, (batch_big, state_dim), jnp.float32)
    q_big = jax.block_until_ready(dueling_mlp_forward(state_big, packed, action_dim))
    q_big_ref = reference_forward(state_big, packed, action_dim)
    assert q_big.shape == (batch_big, action_dim)
    assert jnp.allclose(q_big, q_big_ref, atol=2e-3, rtol=2e-3)

    print("KERNEL_OK")
</pallas_src>

<mosaic_0001>
module attributes {stable_mosaic.version = 11 : i64} {
  func.func @dueling_mlp_kernel(%arg0: i32, %arg1: memref<8x32xf32, #tpu.memory_space<vmem>>, %arg2: memref<32x512xbf16, #tpu.memory_space<vmem>>, %arg3: memref<1x512xf32, #tpu.memory_space<vmem>>, %arg4: memref<512x128xbf16, #tpu.memory_space<vmem>>, %arg5: memref<1x128xf32, #tpu.memory_space<vmem>>, %arg6: memref<8x8xf32, #tpu.memory_space<vmem>>) attributes {dimension_semantics = [#tpu.dimension_semantics<parallel>], iteration_bounds = array<i64: 1>, scalar_prefetch = 0 : i64, scratch_operands = 0 : i64, tpu.core_type = #tpu.core_type<tc>, window_params = [{transform_indices = @transform_0, window_bounds = array<i64: 8, 32>}, {pipeline_mode = #tpu.pipeline_mode<synchronous>, transform_indices = @transform_1, window_bounds = array<i64: 32, 512>}, {pipeline_mode = #tpu.pipeline_mode<synchronous>, transform_indices = @transform_2, window_bounds = array<i64: 1, 512>}, {pipeline_mode = #tpu.pipeline_mode<synchronous>, transform_indices = @transform_3, window_bounds = array<i64: 512, 128>}, {pipeline_mode = #tpu.pipeline_mode<synchronous>, transform_indices = @transform_4, window_bounds = array<i64: 1, 128>}, {transform_indices = @transform_5, window_bounds = array<i64: 8, 8>}]} {
    %c0 = arith.constant 0 : index
    %c0_0 = arith.constant 0 : index
    %0 = vector.load %arg1[%c0, %c0_0] : memref<8x32xf32, #tpu.memory_space<vmem>>, vector<8x32xf32>
    %1 = arith.truncf %0 : vector<8x32xf32> to vector<8x32xbf16>
    %c0_1 = arith.constant 0 : index
    %c0_2 = arith.constant 0 : index
    %2 = vector.load %arg2[%c0_1, %c0_2] : memref<32x512xbf16, #tpu.memory_space<vmem>>, vector<32x512xbf16>
    %cst = arith.constant dense<0.000000e+00> : vector<8x512xf32>
    %3 = tpu.matmul %1, %2, %cst {dimension_numbers = #tpu.dot_dimension_numbers<[1], [0], [0], [1], [0, 0, 1, 1], [], []>} : vector<8x32xbf16>, vector<32x512xbf16>, vector<8x512xf32> -> vector<8x512xf32>
    %c0_3 = arith.constant 0 : index
    %c0_4 = arith.constant 0 : index
    %4 = vector.load %arg3[%c0_3, %c0_4] : memref<1x512xf32, #tpu.memory_space<vmem>>, vector<1x512xf32>
    %5 = vector.broadcast %4 : vector<1x512xf32> to vector<8x512xf32>
    %6 = arith.addf %3, %5 : vector<8x512xf32>
    %cst_5 = arith.constant 0.000000e+00 : f32
    %7 = vector.broadcast %cst_5 : f32 to vector<8x512xf32>
    %8 = arith.cmpf oge, %6, %7 : vector<8x512xf32>
    %cst_6 = arith.constant 0.00999999977 : f32
    %9 = vector.broadcast %cst_6 : f32 to vector<8x512xf32>
    %10 = arith.mulf %9, %6 : vector<8x512xf32>
    %11 = arith.select %8, %6, %10 : vector<8x512xi1>, vector<8x512xf32>
    %12 = arith.truncf %11 : vector<8x512xf32> to vector<8x512xbf16>
    %c0_7 = arith.constant 0 : index
    %c0_8 = arith.constant 0 : index
    %13 = vector.load %arg4[%c0_7, %c0_8] : memref<512x128xbf16, #tpu.memory_space<vmem>>, vector<512x128xbf16>
    %cst_9 = arith.constant dense<0.000000e+00> : vector<8x128xf32>
    %14 = tpu.matmul %12, %13, %cst_9 {dimension_numbers = #tpu.dot_dimension_numbers<[1], [0], [0], [1], [0, 0, 1, 1], [], []>} : vector<8x512xbf16>, vector<512x128xbf16>, vector<8x128xf32> -> vector<8x128xf32>
    %c0_10 = arith.constant 0 : index
    %c0_11 = arith.constant 0 : index
    %15 = vector.load %arg5[%c0_10, %c0_11] : memref<1x128xf32, #tpu.memory_space<vmem>>, vector<1x128xf32>
    %16 = vector.broadcast %15 : vector<1x128xf32> to vector<8x128xf32>
    %17 = arith.addf %14, %16 : vector<8x128xf32>
    %18 = vector.extract_strided_slice %17 {offsets = [0, 0], sizes = [8, 8], strides = [1, 1]} : vector<8x128xf32> to vector<8x8xf32>
    %19 = vector.extract_strided_slice %17 {offsets = [0, 8], sizes = [8, 1], strides = [1, 1]} : vector<8x128xf32> to vector<8x1xf32>
    %cst_12 = arith.constant dense<0xFF800000> : vector<8xf32>
    %20 = vector.multi_reduction <maximumf>, %18, %cst_12 [1] : vector<8x8xf32> to vector<8xf32>
    %21 = vector.shape_cast %20 : vector<8xf32> to vector<8x1xf32>
    %22 = vector.broadcast %21 : vector<8x1xf32> to vector<8x8xf32>
    %23 = arith.subf %18, %22 : vector<8x8xf32>
    %24 = vector.broadcast %19 : vector<8x1xf32> to vector<8x8xf32>
    %25 = arith.addf %23, %24 : vector<8x8xf32>
    %c0_13 = arith.constant 0 : index
    %c0_14 = arith.constant 0 : index
    %26 = vector.load %arg6[%c0_13, %c0_14] : memref<8x8xf32, #tpu.memory_space<vmem>>, vector<8x8xf32>
    tpu.vector_store %arg6[%c0_13, %c0_14], %25 {strides = array<i32>} : memref<8x8xf32, #tpu.memory_space<vmem>>, vector<8x8xf32>,
    return
  }
  func.func @transform_0(%arg0: i32) -> (i32, i32) {
    %c0_i32 = arith.constant 0 : i32
    %c0_i32_0 = arith.constant 0 : i32
    return %arg0, %c0_i32 : i32, i32
  }
  func.func @transform_1(%arg0: i32) -> (i32, i32) {
    %c0_i32 = arith.constant 0 : i32
    %c0_i32_0 = arith.constant 0 : i32
    %c0_i32_1 = arith.constant 0 : i32
    return %c0_i32, %c0_i32_0 : i32, i32
  }
  func.func @transform_2(%arg0: i32) -> (i32, i32) {
    %c0_i32 = arith.constant 0 : i32
    %c0_i32_0 = arith.constant 0 : i32
    %c0_i32_1 = arith.constant 0 : i32
    return %c0_i32, %c0_i32_0 : i32, i32
  }
  func.func @transform_3(%arg0: i32) -> (i32, i32) {
    %c0_i32 = arith.constant 0 : i32
    %c0_i32_0 = arith.constant 0 : i32
    %c0_i32_1 = arith.constant 0 : i32
    return %c0_i32, %c0_i32_0 : i32, i32
  }
  func.func @transform_4(%arg0: i32) -> (i32, i32) {
    %c0_i32 = arith.constant 0 : i32
    %c0_i32_0 = arith.constant 0 : i32
    %c0_i32_1 = arith.constant 0 : i32
    return %c0_i32, %c0_i32_0 : i32, i32
  }
  func.func @transform_5(%arg0: i32) -> (i32, i32) {
    %c0_i32 = arith.constant 0 : i32
    %c0_i32_0 = arith.constant 0 : i32
    return %arg0, %c0_i32 : i32, i32
  }
}

</mosaic_0001>

<llo_original>
// kernel: tpu_custom_call.1
$region0: #{tpu_custom_call.1}
  #allocation0 [shape = 'u32[]', space=smem, size = 0x4, offset = 0x4, fixed_abs, tag = 'smem constant byte address 0x4 - core index']
  #allocation1 [shape = 'u32[144,128]{1,0:T(1,128)}', space=vmem, size = 0x12000, scoped, tag = 'internal scratch']
  %s0 = inlined_call_operand.hbm [shape: f32[8,32], index: 0, kind: input, shape index: {}]
  %s1 = inlined_call_operand.hbm [shape: bf16[32,512], index: 1, kind: input, shape index: {}]
  %s2 = inlined_call_operand.vmem [shape: f32[1,512], index: 2, kind: input, shape index: {}]
  %s3 = inlined_call_operand.hbm [shape: bf16[512,128], index: 3, kind: input, shape index: {}]
  %s4 = inlined_call_operand.vmem [shape: f32[1,128], index: 4, kind: input, shape index: {}]
  %s5 = inlined_call_operand.hbm [shape: f32[8,8], index: 5, kind: output, shape index: {}]
  %s6 = sld [smem:[#allocation0]]
  $region42: #{tpu_custom_call.1} parent=0
    _
  %s8 = ssub.s32 1, %s6
  %s9 = scalar_select 0, %s8, %s6
  $region1: #{tpu_custom_call.1} parent=0
    #allocation2 [shape = 'u8[4096]{0}', space=vmem, size = 0x1000, scoped, tag = 'input window, operand 0, single buffered']
    #allocation3 [shape = 's32[1]{0}', space=sflag, size = 0x4, scoped, tag = 'scoped memory for tpu_custom_call.1']
    #allocation4 [shape = 's32[1]{0}', space=sflag, size = 0x4, scoped, tag = 'scoped memory for tpu_custom_call.1']
    #allocation5 [shape = 'u8[32768]{0}', space=vmem, size = 0x8000, scoped, tag = 'input window, operand 1, single buffered']
    #allocation6 [shape = 's32[1]{0}', space=sflag, size = 0x4, scoped, tag = 'scoped memory for tpu_custom_call.1']
    #allocation7 [shape = 'u8[131072]{0}', space=vmem, size = 0x20000, scoped, tag = 'input window, operand 3, single buffered']
    #allocation8 [shape = 'u8[4096]{0}', space=vmem, size = 0x1000, scoped, tag = 'output window, operand 0, single buffered']
    %10 = vsyncpa [#allocation3], 0
    %11 = vsyncpa [#allocation6], 0
    %12 = vsyncpa [#allocation4], 0
    // Predicated region
    $region2: #{tpu_custom_call.1} parent=1 // pred_check
      _
    $region3: #{tpu_custom_call.1} parent=1 // pred_check_branch
      %14 = sbr.rel (0) target = $region5
    $region4: #{tpu_custom_call.1} parent=1 // pred_region
      %s16 = ssub.s32 128, 128
      %17 = vsyncadd [#allocation3], %s16
      %s19 = sshll.u32 [#allocation2], 4
      %s20 = int_to_ptr.vmem [resolvable:$true] %s19
      %22 = dma.hbm_to_vmem [thread:$0]  %s0, 128, %s20, [#allocation3]
    $region5: #{tpu_custom_call.1} parent=1 // pred_fallthru
      _
    // Predicated region
    $region6: #{tpu_custom_call.1} parent=1 // pred_check
      _
    $region7: #{tpu_custom_call.1} parent=1 // pred_check_branch
      %24 = sbr.rel (0) target = $region9
    $region8: #{tpu_custom_call.1} parent=1 // pred_region
      %s26 = ssub.s32 1024, 1024
      %27 = vsyncadd [#allocation6], %s26
      %s28 = sshll.u32 [#allocation5], 4
      %s29 = int_to_ptr.vmem [resolvable:$true] %s28
      %34 = dma.hbm_to_vmem [thread:$0]  %s1, 1024, %s29, [#allocation6], 256, 256, 16
    $region9: #{tpu_custom_call.1} parent=1 // pred_fallthru
      _
    // Predicated region
    $region10: #{tpu_custom_call.1} parent=1 // pred_check
      _
    $region11: #{tpu_custom_call.1} parent=1 // pred_check_branch
      %36 = sbr.rel (0) target = $region13
    $region12: #{tpu_custom_call.1} parent=1 // pred_region
      _
    $region13: #{tpu_custom_call.1} parent=1 // pred_fallthru
      _
    // Predicated region
    $region14: #{tpu_custom_call.1} parent=1 // pred_check
      _
    $region15: #{tpu_custom_call.1} parent=1 // pred_check_branch
      %38 = sbr.rel (0) target = $region17
    $region16: #{tpu_custom_call.1} parent=1 // pred_region
      %s40 = ssub.s32 4096, 4096
      %41 = vsyncadd [#allocation6], %s40
      %s42 = sshll.u32 [#allocation7], 4
      %s43 = int_to_ptr.vmem [resolvable:$true] %s42
      %48 = dma.hbm_to_vmem [thread:$0]  %s3, 4096, %s43, [#allocation6], 64, 64, 4
    $region17: #{tpu_custom_call.1} parent=1 // pred_fallthru
      _
    // Predicated region
    $region18: #{tpu_custom_call.1} parent=1 // pred_check
      _
    $region19: #{tpu_custom_call.1} parent=1 // pred_check_branch
      %50 = sbr.rel (0) target = $region21
    $region20: #{tpu_custom_call.1} parent=1 // pred_region
      _
    $region21: #{tpu_custom_call.1} parent=1 // pred_fallthru
      _
    // Predicated region
    $region22: #{tpu_custom_call.1} parent=1 // pred_check
      _
    $region23: #{tpu_custom_call.1} parent=1 // pred_check_branch
      %52 = sbr.rel (0) target = $region25
    $region24: #{tpu_custom_call.1} parent=1 // pred_region
      %53 = dma.done [#allocation3], 128
    $region25: #{tpu_custom_call.1} parent=1 // pred_fallthru
      _
    // Predicated region
    $region26: #{tpu_custom_call.1} parent=1 // pred_check
      _
    $region27: #{tpu_custom_call.1} parent=1 // pred_check_branch
      %55 = sbr.rel (0) target = $region29
    $region28: #{tpu_custom_call.1} parent=1 // pred_region
      %56 = dma.done [#allocation6], 1024
    $region29: #{tpu_custom_call.1} parent=1 // pred_fallthru
      _
    // Predicated region
    $region30: #{tpu_custom_call.1} parent=1 // pred_check
      _
    $region31: #{tpu_custom_call.1} parent=1 // pred_check_branch
      %58 = sbr.rel (0) target = $region33
    $region32: #{tpu_custom_call.1} parent=1 // pred_region
      %59 = dma.done [#allocation6], 4096
    $region33: #{tpu_custom_call.1} parent=1 // pred_fallthru
      _
    %v61 = vld [vmem:[#allocation2] sm:$0xff]
    %v62 = vpack.c.bf16 %v61, %v61
    %v63 = vld [vmem:[#allocation5] sm:$0xff]
    %v64 = vld [vmem:[#allocation5 + $0x8] sm:$0xff]
    %v65 = vld [vmem:[#allocation5 + $0x10] sm:$0xff]
    %v66 = vld [vmem:[#allocation5 + $0x18] sm:$0xff]
    %v67 = vld [vmem:[#allocation5 + $0x20] sm:$0xff]
    %v68 = vld [vmem:[#allocation5 + $0x28] sm:$0xff]
    %v69 = vld [vmem:[#allocation5 + $0x30] sm:$0xff]
    %v70 = vld [vmem:[#allocation5 + $0x38] sm:$0xff]
    %v71 = vld [vmem:[%s2] sm:$0xf]
    %v73 = vlaneseq
    %v74 = vshrl.u32 %v73, 7
    %v75 = vsub.s32 0, %v74
    %v76 = vrot.slane %v71, %v75
    %v77 = vlaneseq
    %v78 = vshrl.u32 %v77, 7
    %v79 = vsub.s32 1, %v78
    %v80 = vrot.slane %v71, %v79
    %v81 = vlaneseq
    %v82 = vshrl.u32 %v81, 7
    %v83 = vsub.s32 2, %v82
    %v84 = vrot.slane %v71, %v83
    %v85 = vlaneseq
    %v86 = vshrl.u32 %v85, 7
    %v87 = vsub.s32 3, %v86
    %v88 = vrot.slane %v71, %v87
    %v101 = vunpack.c.l.b16 %v63
    %v102 = vunpack.c.h.b16 %v63
    %v103 = vunpack.c.l.b16 %v64
    %v104 = vunpack.c.h.b16 %v64
    %v105 = vunpack.c.l.b16 %v65
    %v106 = vunpack.c.h.b16 %v65
    %v107 = vunpack.c.l.b16 %v66
    %v108 = vunpack.c.h.b16 %v66
    %v109 = vunpack.c.l.b16 %v67
    %v110 = vunpack.c.h.b16 %v67
    %v111 = vunpack.c.l.b16 %v68
    %v112 = vunpack.c.h.b16 %v68
    %v113 = vunpack.c.l.b16 %v69
    %v114 = vunpack.c.h.b16 %v69
    %v115 = vunpack.c.l.b16 %v70
    %v116 = vunpack.c.h.b16 %v70
    %v117 = vpack.c.b16 %v105, %v101
    %v118 = vpack.c.b16 %v106, %v102
    %v119 = vpack.c.b16 %v107, %v103
    %v120 = vpack.c.b16 %v108, %v104
    %v121 = vpack.c.b16 %v113, %v109
    %v122 = vpack.c.b16 %v114, %v110
    %v123 = vpack.c.b16 %v115, %v111
    %v124 = vpack.c.b16 %v116, %v112
    %vm133 = vcmask 261120
    %v135 = vsel %vm133, %v62, 0
    %137 = vmatprep.subr.bf16.mxu0 %v118
    %138 = vmatpush1.bf16.msra.mxu0 %v117
    %139 = vmatprep.subr.bf16.mxu0 %v122
    %140 = vmatpush1.bf16.msra.mxu0 %v121
    %141 = vmatprep.subr.bf16.mxu0 0
    %142 = vmatpush1.bf16.msra.mxu0 0
    %143 = vmatprep.subr.bf16.mxu0 0
    %144 = vmatpush1.bf16.msra.mxu0 0
    %145 = vmatprep.subr.bf16.mxu0 0
    %146 = vmatpush1.bf16.msra.mxu0 0
    %147 = vmatprep.subr.bf16.mxu0 0
    %148 = vmatpush1.bf16.msra.mxu0 0
    %149 = vmatprep.subr.bf16.mxu0 0
    %150 = vmatpush1.bf16.msra.mxu0 0
    %151 = vmatprep.subr.bf16.mxu0 0
    %152 = vmatpush1.bf16.msra.mxu0 0
    %153 = vmatprep.subr.bf16.mxu0 0
    %154 = vmatpush1.bf16.msra.mxu0 0
    %155 = vmatprep.subr.bf16.mxu0 0
    %156 = vmatpush1.bf16.msra.mxu0 0
    %157 = vmatprep.subr.bf16.mxu0 0
    %158 = vmatpush1.bf16.msra.mxu0 0
    %159 = vmatprep.subr.bf16.mxu0 0
    %160 = vmatpush1.bf16.msra.mxu0 0
    %161 = vmatprep.subr.bf16.mxu0 0
    %162 = vmatpush1.bf16.msra.mxu0 0
    %163 = vmatprep.subr.bf16.mxu0 0
    %164 = vmatpush1.bf16.msra.mxu0 0
    %165 = vmatprep.subr.bf16.mxu0 0
    %166 = vmatpush1.bf16.msra.mxu0 0
    %167 = vmatprep.subr.bf16.mxu0 0
    %168 = vmatpush1.bf16.msra.mxu0 0
    %169 = vmatprep.mubr.bf16.mxu0 0
    %170 = vmatmul.mubr.bf16.gmra.mrb[0].mxu0 %v135
    %v171 = vpop.f32.mrb[0].mxu0
    %v172 = vadd.f32 %v76, %v171
    %v173 = vpop.f32.mrb[0].mxu0
    %v174 = vadd.f32 %v80, %v173
    %v175 = vpop.f32.mrb[0].mxu0
    %v176 = vpop.f32.mrb[0].mxu0
    %177 = vdwg.mxu0
    %178 = vmatprep.subr.bf16.mxu0 %v120
    %179 = vmatpush1.bf16.msra.mxu0 %v119
    %180 = vmatprep.subr.bf16.mxu0 %v124
    %181 = vmatpush1.bf16.msra.mxu0 %v123
    %182 = vmatprep.subr.bf16.mxu0 0
    %183 = vmatpush1.bf16.msra.mxu0 0
    %184 = vmatprep.subr.bf16.mxu0 0
    %185 = vmatpush1.bf16.msra.mxu0 0
    %186 = vmatprep.subr.bf16.mxu0 0
    %187 = vmatpush1.bf16.msra.mxu0 0
    %188 = vmatprep.subr.bf16.mxu0 0
    %189 = vmatpush1.bf16.msra.mxu0 0
    %190 = vmatprep.subr.bf16.mxu0 0
    %191 = vmatpush1.bf16.msra.mxu0 0
    %192 = vmatprep.subr.bf16.mxu0 0
    %193 = vmatpush1.bf16.msra.mxu0 0
    %194 = vmatprep.subr.bf16.mxu0 0
    %195 = vmatpush1.bf16.msra.mxu0 0
    %196 = vmatprep.subr.bf16.mxu0 0
    %197 = vmatpush1.bf16.msra.mxu0 0
    %198 = vmatprep.subr.bf16.mxu0 0
    %199 = vmatpush1.bf16.msra.mxu0 0
    %200 = vmatprep.subr.bf16.mxu0 0
    %201 = vmatpush1.bf16.msra.mxu0 0
    %202 = vmatprep.subr.bf16.mxu0 0
    %203 = vmatpush1.bf16.msra.mxu0 0
    %204 = vmatprep.subr.bf16.mxu0 0
    %205 = vmatpush1.bf16.msra.mxu0 0
    %206 = vmatprep.subr.bf16.mxu0 0
    %207 = vmatpush1.bf16.msra.mxu0 0
    %208 = vmatprep.subr.bf16.mxu0 0
    %209 = vmatpush1.bf16.msra.mxu0 0
    %210 = vmatprep.mubr.bf16.mxu0 0
    %211 = vmatmul.mubr.bf16.gmra.mrb[0].mxu0 %v135
    %v212 = vpop.f32.mrb[0].mxu0
    %v213 = vadd.f32 %v84, %v212
    %v214 = vpop.f32.mrb[0].mxu0
    %v215 = vadd.f32 %v88, %v214
    %v216 = vpop.f32.mrb[0].mxu0
    %v217 = vpop.f32.mrb[0].mxu0
    %218 = vdwg.mxu0
    %vm219 = vcmp.ge.f32.partialorder %v172, 0.0
    %vm220 = vcmp.ge.f32.partialorder %v174, 0.0
    %vm221 = vcmp.ge.f32.partialorder %v213, 0.0
    %vm222 = vcmp.ge.f32.partialorder %v215, 0.0
    %v223 = vmul.f32 %v172, 0.01
    %v224 = vmul.f32 %v174, 0.01
    %v225 = vmul.f32 %v213, 0.01
    %v226 = vmul.f32 %v215, 0.01
    %v227 = vsel %vm219, %v172, %v223
    %v228 = vsel %vm220, %v174, %v224
    %v229 = vsel %vm221, %v213, %v225
    %v230 = vsel %vm222, %v215, %v226
    %v231 = vpack.c.bf16 %v227, %v227
    %v232 = vpack.c.bf16 %v228, %v228
    %v233 = vpack.c.bf16 %v229, %v229
    %v234 = vpack.c.bf16 %v230, %v230
    %v235 = vld [vmem:[#allocation7] sm:$0xf]
    %v236 = vld [vmem:[#allocation7 + $0x4] sm:$0xf]
    %v237 = vld [vmem:[#allocation7 + $0x8] sm:$0xf]
    %v238 = vld [vmem:[#allocation7 + $0xc] sm:$0xf]
    %v239 = vld [vmem:[#allocation7 + $0x10] sm:$0xf]
    %v240 = vld [vmem:[#allocation7 + $0x14] sm:$0xf]
    %v241 = vld [vmem:[#allocation7 + $0x18] sm:$0xf]
    %v242 = vld [vmem:[#allocation7 + $0x1c] sm:$0xf]
    %v243 = vld [vmem:[#allocation7 + $0x20] sm:$0xf]
    %v244 = vld [vmem:[#allocation7 + $0x24] sm:$0xf]
    %v245 = vld [vmem:[#allocation7 + $0x28] sm:$0xf]
    %v246 = vld [vmem:[#allocation7 + $0x2c] sm:$0xf]
    %v247 = vld [vmem:[#allocation7 + $0x30] sm:$0xf]
    %v248 = vld [vmem:[#allocation7 + $0x34] sm:$0xf]
    %v249 = vld [vmem:[#allocation7 + $0x38] sm:$0xf]
    %v250 = vld [vmem:[#allocation7 + $0x3c] sm:$0xf]
    %v251 = vld [vmem:[#allocation7 + $0x40] sm:$0xf]
    %v252 = vld [vmem:[#allocation7 + $0x44] sm:$0xf]
    %v253 = vld [vmem:[#allocation7 + $0x48] sm:$0xf]
    %v254 = vld [vmem:[#allocation7 + $0x4c] sm:$0xf]
    %v255 = vld [vmem:[#allocation7 + $0x50] sm:$0xf]
    %v256 = vld [vmem:[#allocation7 + $0x54] sm:$0xf]
    %v257 = vld [vmem:[#allocation7 + $0x58] sm:$0xf]
    %v258 = vld [vmem:[#allocation7 + $0x5c] sm:$0xf]
    %v259 = vld [vmem:[#allocation7 + $0x60] sm:$0xf]
    %v260 = vld [vmem:[#allocation7 + $0x64] sm:$0xf]
    %v261 = vld [vmem:[#allocation7 + $0x68] sm:$0xf]
    %v262 = vld [vmem:[#allocation7 + $0x6c] sm:$0xf]
    %v263 = vld [vmem:[#allocation7 + $0x70] sm:$0xf]
    %v264 = vld [vmem:[#allocation7 + $0x74] sm:$0xf]
    %v265 = vld [vmem:[#allocation7 + $0x78] sm:$0xf]
    %v266 = vld [vmem:[#allocation7 + $0x7c] sm:$0xf]
    %v267 = vld [vmem:[#allocation7 + $0x80] sm:$0xf]
    %v268 = vld [vmem:[#allocation7 + $0x84] sm:$0xf]
    %v269 = vld [vmem:[#allocation7 + $0x88] sm:$0xf]
    %v270 = vld [vmem:[#allocation7 + $0x8c] sm:$0xf]
    %v271 = vld [vmem:[#allocation7 + $0x90] sm:$0xf]
    %v272 = vld [vmem:[#allocation7 + $0x94] sm:$0xf]
    %v273 = vld [vmem:[#allocation7 + $0x98] sm:$0xf]
    %v274 = vld [vmem:[#allocation7 + $0x9c] sm:$0xf]
    %v275 = vld [vmem:[#allocation7 + $0xa0] sm:$0xf]
    %v276 = vld [vmem:[#allocation7 + $0xa4] sm:$0xf]
    %v277 = vld [vmem:[#allocation7 + $0xa8] sm:$0xf]
    %v278 = vld [vmem:[#allocation7 + $0xac] sm:$0xf]
    %v279 = vld [vmem:[#allocation7 + $0xb0] sm:$0xf]
    %v280 = vld [vmem:[#allocation7 + $0xb4] sm:$0xf]
    %v281 = vld [vmem:[#allocation7 + $0xb8] sm:$0xf]
    %v282 = vld [vmem:[#allocation7 + $0xbc] sm:$0xf]
    %v283 = vld [vmem:[#allocation7 + $0xc0] sm:$0xf]
    %v284 = vld [vmem:[#allocation7 + $0xc4] sm:$0xf]
    %v285 = vld [vmem:[#allocation7 + $0xc8] sm:$0xf]
    %v286 = vld [vmem:[#allocation7 + $0xcc] sm:$0xf]
    %v287 = vld [vmem:[#allocation7 + $0xd0] sm:$0xf]
    %v288 = vld [vmem:[#allocation7 + $0xd4] sm:$0xf]
    %v289 = vld [vmem:[#allocation7 + $0xd8] sm:$0xf]
    %v290 = vld [vmem:[#allocation7 + $0xdc] sm:$0xf]
    %v291 = vld [vmem:[#allocation7 + $0xe0] sm:$0xf]
    %v292 = vld [vmem:[#allocation7 + $0xe4] sm:$0xf]
    %v293 = vld [vmem:[#allocation7 + $0xe8] sm:$0xf]
    %v294 = vld [vmem:[#allocation7 + $0xec] sm:$0xf]
    %v295 = vld [vmem:[#allocation7 + $0xf0] sm:$0xf]
    %v296 = vld [vmem:[#allocation7 + $0xf4] sm:$0xf]
    %v297 = vld [vmem:[#allocation7 + $0xf8] sm:$0xf]
    %v298 = vld [vmem:[#allocation7 + $0xfc] sm:$0xf]
    %v299 = vld [vmem:[%s4] sm:$0x1]
    %v301 = vlaneseq
    %v302 = vshrl.u32 %v301, 7
    %v303 = vsub.s32 0, %v302
    %v304 = vrot.slane %v299, %v303
    %v370 = vunpack.c.l.b16 %v235
    %v371 = vunpack.c.l.b16 %v236
    %v372 = vunpack.c.l.b16 %v237
    %v373 = vunpack.c.l.b16 %v238
    %v374 = vunpack.c.l.b16 %v239
    %v375 = vunpack.c.l.b16 %v240
    %v376 = vunpack.c.l.b16 %v241
    %v377 = vunpack.c.l.b16 %v242
    %v378 = vunpack.c.l.b16 %v243
    %v379 = vunpack.c.l.b16 %v244
    %v380 = vunpack.c.l.b16 %v245
    %v381 = vunpack.c.l.b16 %v246
    %v382 = vunpack.c.l.b16 %v247
    %v383 = vunpack.c.l.b16 %v248
    %v384 = vunpack.c.l.b16 %v249
    %v385 = vunpack.c.l.b16 %v250
    %v386 = vunpack.c.l.b16 %v251
    %v387 = vunpack.c.l.b16 %v252
    %v388 = vunpack.c.l.b16 %v253
    %v389 = vunpack.c.l.b16 %v254
    %v390 = vunpack.c.l.b16 %v255
    %v391 = vunpack.c.l.b16 %v256
    %v392 = vunpack.c.l.b16 %v257
    %v393 = vunpack.c.l.b16 %v258
    %v394 = vunpack.c.l.b16 %v259
    %v395 = vunpack.c.l.b16 %v260
    %v396 = vunpack.c.l.b16 %v261
    %v397 = vunpack.c.l.b16 %v262
    %v398 = vunpack.c.l.b16 %v263
    %v399 = vunpack.c.l.b16 %v264
    %v400 = vunpack.c.l.b16 %v265
    %v401 = vunpack.c.l.b16 %v266
    %v402 = vunpack.c.l.b16 %v267
    %v403 = vunpack.c.l.b16 %v268
    %v404 = vunpack.c.l.b16 %v269
    %v405 = vunpack.c.l.b16 %v270
    %v406 = vunpack.c.l.b16 %v271
    %v407 = vunpack.c.l.b16 %v272
    %v408 = vunpack.c.l.b16 %v273
    %v409 = vunpack.c.l.b16 %v274
    %v410 = vunpack.c.l.b16 %v275
    %v411 = vunpack.c.l.b16 %v276
    %v412 = vunpack.c.l.b16 %v277
    %v413 = vunpack.c.l.b16 %v278
    %v414 = vunpack.c.l.b16 %v279
    %v415 = vunpack.c.l.b16 %v280
    %v416 = vunpack.c.l.b16 %v281
    %v417 = vunpack.c.l.b16 %v282
    %v418 = vunpack.c.l.b16 %v283
    %v419 = vunpack.c.l.b16 %v284
    %v420 = vunpack.c.l.b16 %v285
    %v421 = vunpack.c.l.b16 %v286
    %v422 = vunpack.c.l.b16 %v287
    %v423 = vunpack.c.l.b16 %v288
    %v424 = vunpack.c.l.b16 %v289
    %v425 = vunpack.c.l.b16 %v290
    %v426 = vunpack.c.l.b16 %v291
    %v427 = vunpack.c.l.b16 %v292
    %v428 = vunpack.c.l.b16 %v293
    %v429 = vunpack.c.l.b16 %v294
    %v430 = vunpack.c.l.b16 %v295
    %v431 = vunpack.c.l.b16 %v296
    %v432 = vunpack.c.l.b16 %v297
    %v433 = vunpack.c.l.b16 %v298
    %v434 = vpack.c.b16 %v371, %v370
    %v435 = vpack.c.b16 %v373, %v372
    %v436 = vpack.c.b16 %v375, %v374
    %v437 = vpack.c.b16 %v377, %v376
    %v438 = vpack.c.b16 %v379, %v378
    %v439 = vpack.c.b16 %v381, %v380
    %v440 = vpack.c.b16 %v383, %v382
    %v441 = vpack.c.b16 %v385, %v384
    %v442 = vpack.c.b16 %v387, %v386
    %v443 = vpack.c.b16 %v389, %v388
    %v444 = vpack.c.b16 %v391, %v390
    %v445 = vpack.c.b16 %v393, %v392
    %v446 = vpack.c.b16 %v395, %v394
    %v447 = vpack.c.b16 %v397, %v396
    %v448 = vpack.c.b16 %v399, %v398
    %v449 = vpack.c.b16 %v401, %v400
    %v450 = vpack.c.b16 %v403, %v402
    %v451 = vpack.c.b16 %v405, %v404
    %v452 = vpack.c.b16 %v407, %v406
    %v453 = vpack.c.b16 %v409, %v408
    %v454 = vpack.c.b16 %v411, %v410
    %v455 = vpack.c.b16 %v413, %v412
    %v456 = vpack.c.b16 %v415, %v414
    %v457 = vpack.c.b16 %v417, %v416
    %v458 = vpack.c.b16 %v419, %v418
    %v459 = vpack.c.b16 %v421, %v420
    %v460 = vpack.c.b16 %v423, %v422
    %v461 = vpack.c.b16 %v425, %v424
    %v462 = vpack.c.b16 %v427, %v426
    %v463 = vpack.c.b16 %v429, %v428
    %v464 = vpack.c.b16 %v431, %v430
    %v465 = vpack.c.b16 %v433, %v432
    %498 = vmatprep.subr.bf16.mxu0 0
    %499 = vmatpush1.bf16.msra.mxu0 %v434
    %500 = vmatprep.subr.bf16.mxu0 0
    %501 = vmatpush1.bf16.msra.mxu0 %v435
    %502 = vmatprep.subr.bf16.mxu0 0
    %503 = vmatpush1.bf16.msra.mxu0 %v436
    %504 = vmatprep.subr.bf16.mxu0 0
    %505 = vmatpush1.bf16.msra.mxu0 %v437
    %506 = vmatprep.subr.bf16.mxu0 0
    %507 = vmatpush1.bf16.msra.mxu0 %v438
    %508 = vmatprep.subr.bf16.mxu0 0
    %509 = vmatpush1.bf16.msra.mxu0 %v439
    %510 = vmatprep.subr.bf16.mxu0 0
    %511 = vmatpush1.bf16.msra.mxu0 %v440
    %512 = vmatprep.subr.bf16.mxu0 0
    %513 = vmatpush1.bf16.msra.mxu0 %v441
    %514 = vmatprep.subr.bf16.mxu0 0
    %515 = vmatpush1.bf16.msra.mxu0 %v442
    %516 = vmatprep.subr.bf16.mxu0 0
    %517 = vmatpush1.bf16.msra.mxu0 %v443
    %518 = vmatprep.subr.bf16.mxu0 0
    %519 = vmatpush1.bf16.msra.mxu0 %v444
    %520 = vmatprep.subr.bf16.mxu0 0
    %521 = vmatpush1.bf16.msra.mxu0 %v445
    %522 = vmatprep.subr.bf16.mxu0 0
    %523 = vmatpush1.bf16.msra.mxu0 %v446
    %524 = vmatprep.subr.bf16.mxu0 0
    %525 = vmatpush1.bf16.msra.mxu0 %v447
    %526 = vmatprep.subr.bf16.mxu0 0
    %527 = vmatpush1.bf16.msra.mxu0 %v448
    %528 = vmatprep.subr.bf16.mxu0 0
    %529 = vmatpush1.bf16.msra.mxu0 %v449
    %530 = vmatprep.mubr.bf16.mxu0 %v232
    %531 = vmatmul.mubr.bf16.gmra.mrb[0].mxu0 %v231
    %v532 = vpop.f32.mrb[0].mxu0
    %v533 = vadd.f32 %v304, %v532
    %v534 = vpop.f32.mrb[0].mxu0
    %v535 = vpop.f32.mrb[0].mxu0
    %v536 = vpop.f32.mrb[0].mxu0
    %537 = vdwg.mxu0
    %538 = vmatprep.subr.bf16.mxu0 0
    %539 = vmatpush1.bf16.msra.mxu0 %v450
    %540 = vmatprep.subr.bf16.mxu0 0
    %541 = vmatpush1.bf16.msra.mxu0 %v451
    %542 = vmatprep.subr.bf16.mxu0 0
    %543 = vmatpush1.bf16.msra.mxu0 %v452
    %544 = vmatprep.subr.bf16.mxu0 0
    %545 = vmatpush1.bf16.msra.mxu0 %v453
    %546 = vmatprep.subr.bf16.mxu0 0
    %547 = vmatpush1.bf16.msra.mxu0 %v454
    %548 = vmatprep.subr.bf16.mxu0 0
    %549 = vmatpush1.bf16.msra.mxu0 %v455
    %550 = vmatprep.subr.bf16.mxu0 0
    %551 = vmatpush1.bf16.msra.mxu0 %v456
    %552 = vmatprep.subr.bf16.mxu0 0
    %553 = vmatpush1.bf16.msra.mxu0 %v457
    %554 = vmatprep.subr.bf16.mxu0 0
    %555 = vmatpush1.bf16.msra.mxu0 %v458
    %556 = vmatprep.subr.bf16.mxu0 0
    %557 = vmatpush1.bf16.msra.mxu0 %v459
    %558 = vmatprep.subr.bf16.mxu0 0
    %559 = vmatpush1.bf16.msra.mxu0 %v460
    %560 = vmatprep.subr.bf16.mxu0 0
    %561 = vmatpush1.bf16.msra.mxu0 %v461
    %562 = vmatprep.subr.bf16.mxu0 0
    %563 = vmatpush1.bf16.msra.mxu0 %v462
    %564 = vmatprep.subr.bf16.mxu0 0
    %565 = vmatpush1.bf16.msra.mxu0 %v463
    %566 = vmatprep.subr.bf16.mxu0 0
    %567 = vmatpush1.bf16.msra.mxu0 %v464
    %568 = vmatprep.subr.bf16.mxu0 0
    %569 = vmatpush1.bf16.msra.mxu0 %v465
    %570 = vmatprep.mubr.bf16.mxu0 %v234
    %571 = vmatmul.mubr.bf16.gmra.mrb[0].mxu0 %v233
    %v572 = vpop.f32.mrb[0].mxu0
    %v573 = vadd.f32 %v533, %v572
    %v574 = vpop.f32.mrb[0].mxu0
    %v575 = vpop.f32.mrb[0].mxu0
    %v576 = vpop.f32.mrb[0].mxu0
    %577 = vdwg.mxu0
    %vm578 = vcmask 64512
    %v579 = vsel %vm578, %v573, -inf
    %580 = vmax.xlane.f32.xlu0 %v579
    %v581 = vpop.xlane.xlu0 %580
    %v582 = vsub.f32 %v573, %v581
    %584 = vset.pattern.permute.xlu0 8
    %585 = vperm.xlu0 %584, %v573
    %v586 = vpop.permute.xlu0 %585
    %v588 = vadd.f32 %v582, %v586
    %589 = vst.msk [vmem:[#allocation8] sm:$0xff] %vm578, %v588
    // Predicated region
    $region34: #{tpu_custom_call.1} parent=1 // pred_check
      _
    $region35: #{tpu_custom_call.1} parent=1 // pred_check_branch
      %591 = sbr.rel (0) target = $region37
    $region36: #{tpu_custom_call.1} parent=1 // pred_region
      %s593 = ssub.s32 128, 128
      %594 = vsyncadd [#allocation4], %s593
      %s596 = sshll.u32 [#allocation8], 4
      %s597 = int_to_ptr.vmem [resolvable:$true] %s596
      %599 = dma.vmem_to_hbm [thread:$0]  %s597, 128, %s5, [#allocation4]
    $region37: #{tpu_custom_call.1} parent=1 // pred_fallthru
      _
    // Predicated region
    $region38: #{tpu_custom_call.1} parent=1 // pred_check
      _
    $region39: #{tpu_custom_call.1} parent=1 // pred_check_branch
      %601 = sbr.rel (0) target = $region41
    $region40: #{tpu_custom_call.1} parent=1 // pred_region
      %602 = dma.done [#allocation4], 128
    $region41: #{tpu_custom_call.1} parent=1 // pred_fallthru
      _
    %603 = vsyncpa [#allocation3], 1
    %604 = vsyncpa [#allocation6], 1
    %605 = vsyncpa [#allocation4], 1

</llo_original>
